<compile_context>
chip_gen: v7x
topology: tpu7x:2x2x1
jax: 0.10.0
libtpu: 0.0.40
codegen_flags: <defaults>
</compile_context>

<pallas_src>
import functools

import jax
import jax.numpy as jnp
from jax import lax
from jax.experimental import pallas as pl
from jax.experimental.pallas import tpu as pltpu

_LANE = 128
_CHUNK_PIX = 2048        # in-kernel pixel chunk: bounds f32 intermediates in VMEM/vregs
_CONV2_VPU_MAX_C2 = 64   # up to this many channels conv2 stays on the VPU + XLU reduce


# --------------------------------------------------------------------------- #
# Tiling / VMEM planning helpers
# --------------------------------------------------------------------------- #
def _roundup(x, m):
    return ((x + m - 1) // m) * m


def _sublane_mult(itemsize):
    # sublane packing multiple: f32 -> 8, bf16 -> 16, (u)int8/fp8 -> 32
    return 8 * (4 // itemsize)


def _legalize_tp(tp, hw):
    """Legal, chunk-compatible pixel-tile size (multiple of 128 or full dim)."""
    tp = max(1, min(int(tp), hw))
    if hw <= _CHUNK_PIX:
        if tp >= hw or hw < _LANE:
            return hw                                # full-dim block is always legal
        return max(_LANE, (tp // _LANE) * _LANE)
    if tp <= _CHUNK_PIX:
        return max(_LANE, (tp // _LANE) * _LANE)     # single chunk per block
    return (tp // _CHUNK_PIX) * _CHUNK_PIX           # keep tp a multiple of the chunk


def _hw_knobs():
    """Generation-conditional knobs derived from the VMEM size of the part."""
    vmem_phys = 64 << 20
    try:
        vmem_phys = int(getattr(pltpu.get_tpu_info(), "vmem_capacity_bytes", vmem_phys))
    except Exception:
        pass
    if vmem_phys <= (80 << 20):
        # v7x-class: 64 MiB VMEM / TensorCore, ~3.2 TB/s HBM, 2 TCs per chip.
        return {"vmem_cap": 48 << 20, "traffic_target": 12 << 20, "min_steps": 4}
    # v5e / v6e: 128 MiB VMEM, single TensorCore per chip, lower HBM BW.
    return {"vmem_cap": 100 << 20, "traffic_target": 5 << 20, "min_steps": 1}


def _io_bytes_per_px(C, act_it, out_it):
    """Double-buffered x/g/out VMEM bytes per (image, pixel), sublane-padded."""
    pad_in = _roundup(C, _sublane_mult(act_it))
    pad_out = _roundup(C, _sublane_mult(out_it))
    return 2 * (2 * pad_in * act_it + pad_out * out_it)


def _scratch_bytes_per_chunk_px(C, act_it):
    """f32 compute scratch per chunk pixel: h[2C], f32 gating copy, alpha rows."""
    pad_in = _roundup(C, _sublane_mult(act_it))
    pad_c2 = _roundup(2 * C, 8)
    return 4 * (pad_c2 + pad_in + 16)


def _fixed_bytes(C):
    """Resident lane-padded weights + generous Mosaic internal slack."""
    pad_c2 = _roundup(2 * C, 8)
    lanes = max(_LANE, _roundup(C, _LANE))
    return 4 * (2 * pad_c2 * lanes + pad_c2 * _LANE) + (4 << 20)


def _plan(N, C, HW, act_it, out_it, knobs):
    """Choose (batch block nb, pixel tile tp) from the HBM-traffic target and VMEM budget."""
    io_px = _io_bytes_per_px(C, act_it, out_it)
    traffic_px = C * (2 * act_it + out_it)
    budget_px = max(_LANE, (knobs["vmem_cap"] - _fixed_bytes(C)
                            - _scratch_bytes_per_chunk_px(C, act_it) * _CHUNK_PIX) // io_px)

    per_image = traffic_px * HW
    if per_image >= knobs["traffic_target"] or N == 1:
        nb = 1
    else:
        # Small feature maps: pack several images per grid step (bounded unroll).
        nb = min(N,
                 max(1, int(round(knobs["traffic_target"] / per_image))),
                 max(1, budget_px // HW),
                 8)
    tp = min(HW, budget_px // nb,
             max(_LANE, knobs["traffic_target"] // max(1, nb * traffic_px)))
    tp = _legalize_tp(tp, HW)

    def n_steps(nb_, tp_):
        return -(-N // nb_) * -(-HW // tp_)

    # v7x: keep >= min_steps grid steps so the "parallel" axes can feed both TCs.
    while n_steps(nb, tp) < knobs["min_steps"] and nb > 1:
        nb = (nb + 1) // 2
    while n_steps(nb, tp) < knobs["min_steps"] and tp > _LANE:
        new_tp = _legalize_tp(tp // 2, HW)
        if new_tp >= tp:
            break
        tp = new_tp
    return nb, tp


# --------------------------------------------------------------------------- #
# Kernel
# --------------------------------------------------------------------------- #
def sem_fuse_kernel(x_ref, g_ref, w1x_ref, w1g_ref, bw_ref, beff_ref, o_ref, *, chunk):
    """One (nb, C, tp) pixel block; channels on sublanes, pixels lane-dense.

    x_ref, g_ref, o_ref : [nb, C, tp]   activations
    w1x_ref, w1g_ref    : [2C, C]       BN1-folded conv1 weight halves
    bw_ref              : [2C, 2]       col 0 = BN1-folded conv1 bias, col 1 = BN2-folded conv2 weight
    beff_ref            : [1]  (SMEM)   BN2-folded conv2 bias (scalar)

    concat([x, g]) along channels is a split matmul:
        W1 @ concat([x, g]) == W1[:, :C] @ x + W1[:, C:] @ g
    """
    nb, C, tp = x_ref.shape
    c2 = 2 * C
    n_chunks = tp // chunk                      # tp is always a multiple of chunk

    w1x = w1x_ref[...]                          # [2C, C]
    w1g = w1g_ref[...]                          # [2C, C]
    b1 = bw_ref[:, 0:1]                         # [2C, 1] f32
    w2 = bw_ref[:, 1:2]                         # [2C, 1] f32
    beff = beff_ref[0]                          # scalar f32 (SMEM)

    def gate_chunk(b, off):
        xb = x_ref[b, :, pl.ds(off, chunk)]     # [C, chunk], native storage dtype
        gb = g_ref[b, :, pl.ds(off, chunk)]
        # Conv2d(2C, 2C, 1) with BN1 folded in, + ReLU (MXU, f32 accumulation).
        h = (jnp.dot(w1x, xb, preferred_element_type=jnp.float32)
             + jnp.dot(w1g, gb, preferred_element_type=jnp.float32)
             + b1)                              # [2C, chunk] f32
        h = jnp.maximum(h, 0.0)
        # Conv2d(2C, 1, 1) with BN2 folded in.
        if c2 <= _CONV2_VPU_MAX_C2:
            # Small channel count: VPU multiply + sublane reduce (avoids 1-wide MXU output).
            logit = jnp.sum(h * w2, axis=0, keepdims=True) + beff          # [1, chunk]
        else:
            # Large channel count: keep the reduction on the MXU.
            logit = lax.dot_general(w2, h, (((0,), (0,)), ((), ())),
                                    preferred_element_type=jnp.float32) + beff
        alpha = jax.nn.sigmoid(logit)
        out = xb.astype(jnp.float32) * (alpha + 1.0)
        # OOB lanes of boundary blocks hold garbage but are masked on writeback.
        o_ref[b, :, pl.ds(off, chunk)] = out.astype(o_ref.dtype)

    for b in range(nb):                         # nb is small & static (capped at 8)
        if n_chunks == 1:
            gate_chunk(b, 0)
        else:
            def body(ci, carry, b=b):
                gate_chunk(b, pl.multiple_of(ci * chunk, _LANE))
                return carry
            lax.fori_loop(0, n_chunks, body, 0,
                          unroll=True if n_chunks <= 4 else 4)


# --------------------------------------------------------------------------- #
# Wrapper
# --------------------------------------------------------------------------- #
def sem_fuse(input_features, gating_features, params, *,
             out_dtype=None, tile_pixels=None, batch_block=None):
    """input_features, gating_features: [N, C, H, W] (NCHW, like PyTorch).

    Activations are consumed in their incoming dtype (f32 or bf16) — no extra
    HBM cast pass. Output dtype defaults to the input dtype. `tile_pixels` /
    `batch_block` override the auto-derived tiling (mainly for tests).
    """
    N, C, H, W = input_features.shape
    assert gating_features.shape == (N, C, H, W)
    HW = H * W
    C2 = 2 * C
    eps = 1e-5
    act_dtype = input_features.dtype
    out_dtype = act_dtype if out_dtype is None else out_dtype

    # --- Fold BatchNorm1 (eval mode) into conv1. ---
    s1 = params["bn1_gamma"] / jnp.sqrt(params["bn1_var"] + eps)          # [2C]
    t1 = params["bn1_beta"] - params["bn1_mean"] * s1                     # [2C]
    w1 = params["conv1_w"]                                                # [2C, 2C] (out, in)
    w1_eff = w1 * s1[None, :]                                             # scale input columns
    b1_eff = (params["conv1_b"] + w1 @ t1).reshape(C2, 1)                 # [2C, 1]

    # --- Fold BatchNorm2 (single channel, eval mode) into conv2. ---
    s2 = params["bn2_gamma"] / jnp.sqrt(params["bn2_var"] + eps)          # [1]
    t2 = params["bn2_beta"] - params["bn2_mean"] * s2                     # [1]
    w2_eff = (params["conv2_w"] * s2).reshape(C2, 1)                      # [2C, 1]
    b_eff = (params["conv2_b"] * s2 + t2).reshape(1,).astype(jnp.float32) # [1] scalar

    # MXU operand dtype follows the activations (bf16 in -> bf16 matmul, f32 acc).
    w_dtype = jnp.bfloat16 if act_dtype == jnp.bfloat16 else jnp.float32
    w1x_eff = w1_eff[:, :C].astype(w_dtype)                               # [2C, C] (x half)
    w1g_eff = w1_eff[:, C:].astype(w_dtype)                               # [2C, C] (g half)
    bw = jnp.concatenate([b1_eff, w2_eff], axis=1).astype(jnp.float32)    # [2C, 2]

    # NCHW viewed directly as [N, C, H*W] — no transpose, no dtype cast; pixels lane-dense.
    x = input_features.reshape(N, C, HW)
    g = gating_features.reshape(N, C, HW)

    act_it = jnp.dtype(act_dtype).itemsize
    out_it = jnp.dtype(out_dtype).itemsize
    knobs = _hw_knobs()
    nb, tp = _plan(N, C, HW, act_it, out_it, knobs)
    if batch_block is not None:
        nb = max(1, min(int(batch_block), N))
    if tile_pixels is not None:
        tp = _legalize_tp(tile_pixels, HW)
    chunk = min(tp, _CHUNK_PIX)

    # VMEM request covering double-buffered activation blocks (sublane-padded C),
    # the per-chunk f32 intermediates and the (tiny) resident weights.
    need = (nb * tp * _io_bytes_per_px(C, act_it, out_it)
            + chunk * _scratch_bytes_per_chunk_px(C, act_it)
            + _fixed_bytes(C))
    vmem_limit = int(min(knobs["vmem_cap"], max(16 << 20, need)))

    grid = (pl.cdiv(N, nb), pl.cdiv(HW, tp))
    act_spec = pl.BlockSpec((nb, C, tp), lambda n, p: (n, 0, p))
    w_spec = lambda a: pl.BlockSpec(a.shape, lambda n, p: (0,) * a.ndim)

    out_flat = pl.pallas_call(
        functools.partial(sem_fuse_kernel, chunk=chunk),
        out_shape=jax.ShapeDtypeStruct((N, C, HW), out_dtype),
        grid_spec=pltpu.PrefetchScalarGridSpec(
            num_scalar_prefetch=0,
            grid=grid,
            in_specs=[
                act_spec,                                             # x
                act_spec,                                             # g
                w_spec(w1x_eff),                                      # conv1 x-half (BN1 folded)
                w_spec(w1g_eff),                                      # conv1 g-half (BN1 folded)
                w_spec(bw),                                           # [b1_eff | w2_eff]
                pl.BlockSpec(memory_space=pltpu.MemorySpace.SMEM),    # conv2 bias scalar
            ],
            out_specs=act_spec,
        ),
        compiler_params=pltpu.CompilerParams(
            dimension_semantics=("parallel", "parallel"),
            vmem_limit_bytes=vmem_limit),
    )(x, g, w1x_eff, w1g_eff, bw, b_eff)

    return out_flat.reshape(N, C, H, W)


# --------------------------------------------------------------------------- #
# Reference + params
# --------------------------------------------------------------------------- #
def sem_fuse_reference(input_features, gating_features, params):
    """Plain-JAX reference, mirrors the PyTorch module (eval-mode BN)."""
    eps = 1e-5
    z = jnp.concatenate([input_features, gating_features], axis=1)          # [N, 2C, H, W]
    s1 = (params["bn1_gamma"] / jnp.sqrt(params["bn1_var"] + eps))[None, :, None, None]
    t1 = (params["bn1_beta"] - params["bn1_mean"]
          * params["bn1_gamma"] / jnp.sqrt(params["bn1_var"] + eps))[None, :, None, None]
    z = z * s1 + t1
    h = jnp.einsum("oc,nchw->nohw", params["conv1_w"], z) + params["conv1_b"][None, :, None, None]
    h = jnp.maximum(h, 0.0)
    logit = jnp.einsum("oc,nchw->nohw", params["conv2_w"].reshape(1, -1), h) \
        + params["conv2_b"][None, :, None, None]
    s2 = params["bn2_gamma"] / jnp.sqrt(params["bn2_var"] + eps)
    t2 = params["bn2_beta"] - params["bn2_mean"] * s2
    alpha = jax.nn.sigmoid(logit * s2 + t2)
    return input_features * (alpha + 1.0)


def init_params(key, in_channels):
    """Deterministic synthetic parameters matching the PyTorch module's shapes."""
    C2 = 2 * in_channels
    ks = jax.random.split(key, 8)
    return {
        # BatchNorm2d(2C)
        "bn1_gamma": 1.0 + 0.1 * jax.random.normal(ks[0], (C2,), jnp.float32),
        "bn1_beta": 0.1 * jax.random.normal(ks[1], (C2,), jnp.float32),
        "bn1_mean": 0.1 * jax.random.normal(ks[2], (C2,), jnp.float32),
        "bn1_var": jnp.abs(1.0 + 0.1 * jax.random.normal(ks[3], (C2,), jnp.float32)),
        # Conv2d(2C, 2C, 1)
        "conv1_w": 0.2 * jax.random.normal(ks[4], (C2, C2), jnp.float32),
        "conv1_b": 0.05 * jax.random.normal(ks[5], (C2,), jnp.float32),
        # Conv2d(2C, 1, 1)
        "conv2_w": 0.2 * jax.random.normal(ks[6], (C2,), jnp.float32),
        "conv2_b": 0.05 * jax.random.normal(ks[7], (1,), jnp.float32),
        # BatchNorm2d(1)
        "bn2_gamma": jnp.array([1.2], jnp.float32),
        "bn2_beta": jnp.array([-0.1], jnp.float32),
        "bn2_mean": jnp.array([0.05], jnp.float32),
        "bn2_var": jnp.array([0.9], jnp.float32),
    }


if __name__ == "__main__":
    key = jax.random.PRNGKey(0)
    k_x, k_g, k_p, k_x2, k_g2, k_p2 = jax.random.split(key, 6)

    # --- Test 1: small NCHW case, f32, auto-planned tiling. ---
    N, C, H, W = 2, 4, 16, 16
    x = jax.random.normal(k_x, (N, C, H, W), jnp.float32)   # shape branch (canny)
    g = jax.random.normal(k_g, (N, C, H, W), jnp.float32)   # texture branch (resnet)
    params = init_params(k_p, C)
    ref = sem_fuse_reference(x, g, params)
    out = jax.block_until_ready(jax.jit(sem_fuse)(x, g, params))
    assert out.shape == (N, C, H, W) and out.dtype == x.dtype
    assert jnp.allclose(out, ref, atol=1e-5, rtol=1e-5), "f32 mismatch vs reference (test 1)"

    # --- Test 2: force the multi-chunk in-kernel loop + masked pixel tail. ---
    N2, C2, H2, W2 = 1, 8, 64, 80            # HW = 5120 -> tile 4096 (2 chunks) + partial tail
    x2 = jax.random.normal(k_x2, (N2, C2, H2, W2), jnp.float32)
    g2 = jax.random.normal(k_g2, (N2, C2, H2, W2), jnp.float32)
    params2 = init_params(k_p2, C2)
    ref2 = sem_fuse_reference(x2, g2, params2)
    out2 = jax.block_until_ready(
        jax.jit(functools.partial(sem_fuse, tile_pixels=4096, batch_block=1))(x2, g2, params2))
    assert jnp.allclose(out2, ref2, atol=1e-4, rtol=1e-4), "f32 mismatch vs reference (test 2)"

    # --- Test 3: natively-bf16 activations (no wrapper cast); bf16 output, relaxed tol. ---
    xb = x.astype(jnp.bfloat16)
    gb = g.astype(jnp.bfloat16)
    refb = sem_fuse_reference(xb.astype(jnp.float32), gb.astype(jnp.float32), params)
    outb = jax.block_until_ready(jax.jit(sem_fuse)(xb, gb, params))
    assert outb.dtype == jnp.bfloat16
    err = float(jnp.max(jnp.abs(outb.astype(jnp.float32) - refb)))
    assert err < 0.15, f"bf16 path error too large: {err}"

    print("KERNEL_OK")
</pallas_src>

<mosaic_0001>
module attributes {stable_mosaic.version = 11 : i64} {
  func.func @sem_fuse_kernel(%arg0: i32, %arg1: i32, %arg2: memref<1x4x128xf32, #tpu.memory_space<vmem>>, %arg3: memref<1x4x128xf32, #tpu.memory_space<vmem>>, %arg4: memref<8x4xf32, #tpu.memory_space<vmem>>, %arg5: memref<8x4xf32, #tpu.memory_space<vmem>>, %arg6: memref<8x2xf32, #tpu.memory_space<vmem>>, %arg7: memref<1xf32, #tpu.memory_space<smem>>, %arg8: memref<1x4x128xf32, #tpu.memory_space<vmem>>) attributes {dimension_semantics = [#tpu.dimension_semantics<parallel>, #tpu.dimension_semantics<parallel>], iteration_bounds = array<i64: 2, 2>, scalar_prefetch = 0 : i64, scratch_operands = 0 : i64, tpu.core_type = #tpu.core_type<tc>, window_params = [{transform_indices = @transform_0, window_bounds = array<i64: 1, 4, 128>}, {transform_indices = @transform_1, window_bounds = array<i64: 1, 4, 128>}, {pipeline_mode = #tpu.pipeline_mode<synchronous>, transform_indices = @transform_2, window_bounds = array<i64: 8, 4>}, {pipeline_mode = #tpu.pipeline_mode<synchronous>, transform_indices = @transform_3, window_bounds = array<i64: 8, 4>}, {pipeline_mode = #tpu.pipeline_mode<synchronous>, transform_indices = @transform_4, window_bounds = array<i64: 8, 2>}, {transform_indices = @transform_5, window_bounds = array<i64: 1>}, {transform_indices = @transform_6, window_bounds = array<i64: 1, 4, 128>}]} {
    %c0 = arith.constant 0 : index
    %c0_0 = arith.constant 0 : index
    %0 = vector.load %arg4[%c0, %c0_0] : memref<8x4xf32, #tpu.memory_space<vmem>>, vector<8x4xf32>
    %c0_1 = arith.constant 0 : index
    %c0_2 = arith.constant 0 : index
    %1 = vector.load %arg5[%c0_1, %c0_2] : memref<8x4xf32, #tpu.memory_space<vmem>>, vector<8x4xf32>
    %c0_3 = arith.constant 0 : index
    %c0_4 = arith.constant 0 : index
    %2 = vector.load %arg6[%c0_3, %c0_4] : memref<8x2xf32, #tpu.memory_space<vmem>>, vector<8x1xf32>
    %c0_5 = arith.constant 0 : index
    %c1 = arith.constant 1 : index
    %3 = vector.load %arg6[%c0_5, %c1] : memref<8x2xf32, #tpu.memory_space<vmem>>, vector<8x1xf32>
    %c0_6 = arith.constant 0 : index
    %4 = memref.load %arg7[%c0_6] : memref<1xf32, #tpu.memory_space<smem>>
    %c0_7 = arith.constant 0 : index
    %c0_8 = arith.constant 0 : index
    %c0_9 = arith.constant 0 : index
    %5 = vector.load %arg2[%c0_7, %c0_8, %c0_9] : memref<1x4x128xf32, #tpu.memory_space<vmem>>, vector<1x4x128xf32>
    %6 = vector.shape_cast %5 : vector<1x4x128xf32> to vector<4x128xf32>
    %c0_10 = arith.constant 0 : index
    %c0_11 = arith.constant 0 : index
    %c0_12 = arith.constant 0 : index
    %7 = vector.load %arg3[%c0_10, %c0_11, %c0_12] : memref<1x4x128xf32, #tpu.memory_space<vmem>>, vector<1x4x128xf32>
    %8 = vector.shape_cast %7 : vector<1x4x128xf32> to vector<4x128xf32>
    %cst = arith.constant dense<0.000000e+00> : vector<8x128xf32>
    %9 = tpu.matmul %0, %6, %cst {dimension_numbers = #tpu.dot_dimension_numbers<[1], [0], [0], [1], [0, 0, 1, 1], [], []>} : vector<8x4xf32>, vector<4x128xf32>, vector<8x128xf32> -> vector<8x128xf32>
    %cst_13 = arith.constant dense<0.000000e+00> : vector<8x128xf32>
    %10 = tpu.matmul %1, %8, %cst_13 {dimension_numbers = #tpu.dot_dimension_numbers<[1], [0], [0], [1], [0, 0, 1, 1], [], []>} : vector<8x4xf32>, vector<4x128xf32>, vector<8x128xf32> -> vector<8x128xf32>
    %11 = arith.addf %9, %10 : vector<8x128xf32>
    %12 = vector.broadcast %2 : vector<8x1xf32> to vector<8x128xf32>
    %13 = arith.addf %11, %12 : vector<8x128xf32>
    %cst_14 = arith.constant 0.000000e+00 : f32
    %14 = vector.broadcast %cst_14 : f32 to vector<8x128xf32>
    %15 = arith.maximumf %13, %14 : vector<8x128xf32>
    %16 = vector.broadcast %3 : vector<8x1xf32> to vector<8x128xf32>
    %17 = arith.mulf %15, %16 : vector<8x128xf32>
    %cst_15 = arith.constant dense<0.000000e+00> : vector<128xf32>
    %18 = vector.multi_reduction <add>, %17, %cst_15 [0] : vector<8x128xf32> to vector<128xf32>
    %19 = vector.shape_cast %18 : vector<128xf32> to vector<1x128xf32>
    %20 = vector.broadcast %4 : f32 to vector<1x128xf32>
    %21 = arith.addf %19, %20 : vector<1x128xf32>
    %22 = arith.negf %21 : vector<1x128xf32>
    %23 = math.exp %22 : vector<1x128xf32>
    %cst_16 = arith.constant 1.000000e+00 : f32
    %24 = vector.broadcast %cst_16 : f32 to vector<1x128xf32>
    %25 = arith.addf %24, %23 : vector<1x128xf32>
    %26 = arith.divf %24, %25 : vector<1x128xf32>
    %cst_17 = arith.constant 1.000000e+00 : f32
    %27 = vector.broadcast %cst_17 : f32 to vector<1x128xf32>
    %28 = arith.addf %26, %27 : vector<1x128xf32>
    %29 = vector.broadcast %28 : vector<1x128xf32> to vector<4x128xf32>
    %30 = arith.mulf %6, %29 : vector<4x128xf32>
    %c0_18 = arith.constant 0 : index
    %c0_19 = arith.constant 0 : index
    %c0_20 = arith.constant 0 : index
    %31 = vector.load %arg8[%c0_18, %c0_19, %c0_20] : memref<1x4x128xf32, #tpu.memory_space<vmem>>, vector<1x4x128xf32>
    %32 = vector.shape_cast %31 : vector<1x4x128xf32> to vector<4x128xf32>
    %33 = vector.shape_cast %30 : vector<4x128xf32> to vector<1x4x128xf32>
    tpu.vector_store %arg8[%c0_18, %c0_19, %c0_20], %33 {strides = array<i32>} : memref<1x4x128xf32, #tpu.memory_space<vmem>>, vector<1x4x128xf32>,
    return
  }
  func.func @transform_0(%arg0: i32, %arg1: i32) -> (i32, i32, i32) {
    %c0_i32 = arith.constant 0 : i32
    %c0_i32_0 = arith.constant 0 : i32
    return %arg0, %c0_i32, %arg1 : i32, i32, i32
  }
  func.func @transform_1(%arg0: i32, %arg1: i32) -> (i32, i32, i32) {
    %c0_i32 = arith.constant 0 : i32
    %c0_i32_0 = arith.constant 0 : i32
    return %arg0, %c0_i32, %arg1 : i32, i32, i32
  }
  func.func @transform_2(%arg0: i32, %arg1: i32) -> (i32, i32) {
    %c0_i32 = arith.constant 0 : i32
    %c0_i32_0 = arith.constant 0 : i32
    %c0_i32_1 = arith.constant 0 : i32
    return %c0_i32, %c0_i32_0 : i32, i32
  }
  func.func @transform_3(%arg0: i32, %arg1: i32) -> (i32, i32) {
    %c0_i32 = arith.constant 0 : i32
    %c0_i32_0 = arith.constant 0 : i32
    %c0_i32_1 = arith.constant 0 : i32
    return %c0_i32, %c0_i32_0 : i32, i32
  }
  func.func @transform_4(%arg0: i32, %arg1: i32) -> (i32, i32) {
    %c0_i32 = arith.constant 0 : i32
    %c0_i32_0 = arith.constant 0 : i32
    %c0_i32_1 = arith.constant 0 : i32
    return %c0_i32, %c0_i32_0 : i32, i32
  }
  func.func @transform_5(%arg0: i32, %arg1: i32) -> i32 {
    %c0_i32 = arith.constant 0 : i32
    %c0_i32_0 = arith.constant 0 : i32
    return %c0_i32 : i32
  }
  func.func @transform_6(%arg0: i32, %arg1: i32) -> (i32, i32, i32) {
    %c0_i32 = arith.constant 0 : i32
    %c0_i32_0 = arith.constant 0 : i32
    return %arg0, %c0_i32, %arg1 : i32, i32, i32
  }
}

</mosaic_0001>

<llo_original>
// kernel: sem_fuse.1
$region0: #{sem_fuse.1}
  #allocation0 [shape = 'u32[]', space=smem, size = 0x4, offset = 0x4, fixed_abs, tag = 'smem constant byte address 0x4 - core index']
  #allocation1 [shape = 'u32[144,128]{1,0:T(1,128)}', space=vmem, size = 0x12000, scoped, tag = 'internal scratch']
  #allocation2 [shape = 'f32[1]{0:T(128)S(6)}', space=smem, size = 0x200, scoped, tag = 'scoped memory for sem_fuse.1']
  %s0 = inlined_call_operand.vmem [shape: f32[2,4,256], index: 0, kind: input, shape index: {}]
  %s1 = inlined_call_operand.vmem [shape: f32[2,4,256], index: 1, kind: input, shape index: {}]
  %s2 = inlined_call_operand.vmem [shape: f32[8,4], index: 2, kind: input, shape index: {}]
  %s3 = inlined_call_operand.vmem [shape: f32[8,4], index: 3, kind: input, shape index: {}]
  %s4 = inlined_call_operand.vmem [shape: f32[8,2], index: 4, kind: input, shape index: {}]
  %s5 = inlined_call_operand.<no memory space> [shape: f32[1], index: 5, kind: input, shape index: {}]
  %s6 = inlined_call_operand.vmem [shape: f32[2,4,256], index: 6, kind: output, shape index: {}]
  %s7 = sld [smem:[#allocation0]]
  $region57: #{sem_fuse.1} parent=0
    _
  %s9 = ssub.s32 1, %s7
  %s10 = scalar_select 0, %s9, %s7
  %11 = sst [smem:[#allocation2]] %s5
  loop: start=0, step=1, limit=6
  $region2: #{sem_fuse.1} parent=0 // loop_pre_header
    _
  $region3: #{sem_fuse.1} parent=0 // loop_header
    %s13 = sphi 0, %s17
    %p14 = scmp.ge.s32.totalorder %s13, 6
    %s20 = sphi 0, %s32
    %s21 = sphi 0, %s28
    %s22 = sphi 0, %s20
    %s23 = sphi 0, %s21
    %s24 = sphi 0, %s22
    %s25 = sphi 0, %s23
    %s37 = sphi 0, %s39
    %s40 = sphi 0, %s37
    %s41 = sphi 0, %s40
    %s57 = sphi 0, %s41
    %s65 = sphi 0, %s67
    %s68 = sphi 0, %s65
    %s69 = sphi 0, %s68
    %s85 = sphi 0, %s69
    %s89 = sphi 0, %s89
    %s91 = sphi 0, %s89
    %s92 = sphi 0, %s91
    %s106 = sphi 0, %s92
    %s110 = sphi 0, %s110
    %s112 = sphi 0, %s110
    %s113 = sphi 0, %s112
    %s127 = sphi 0, %s113
    %s131 = sphi 0, %s131
    %s133 = sphi 0, %s131
    %s134 = sphi 0, %s133
    %s148 = sphi 0, %s134
    %s152 = sphi 0, %s152
    %s154 = sphi 0, %s152
    %s155 = sphi 0, %s154
    %s169 = sphi 0, %s155
    %s177 = sphi 0, %s179
    %s180 = sphi 0, %s177
    %s181 = sphi 0, %s180
    %s197 = sphi 0, %s181
  $region4: #{sem_fuse.1} parent=0 // loop_header_branch
    %16 = sbr.rel (%p14) target = $region8
  $region5: #{sem_fuse.1} parent=0 // loop_body
    %s18 = ssub.s32 %s13, 1
    %s19 = ssub.s32 %s13, 2
    %s26 = sadd.s32 1, %s21
    %p27 = scmp.ge.s32.totalorder %s26, 2
    %s28 = scalar_select %p27, 0, %s26
    %s29 = sadd.s32 1, %s20
    %s30 = scalar_select %p27, %s29, %s20
    %p31 = scmp.ge.s32.totalorder %s30, 2
    %s32 = scalar_select %p31, 0, %s30
    %s33 = ssub.s32 %s20, %s32
    %s34 = ssub.s32 %s21, %s28
    %s35 = sor.u32 %s33, %s34
    %p36 = scmp.eq.s32.totalorder %s35, 0
    %s38 = sadd.s32 %s37, 1
    %s39 = scalar_select %p36, %s37, %s38
    %p42 = pneg %p36
    %p43 = scmp.eq.s32.totalorder %s13, 3
    %p44 = por %p42, %p43
    %p45 = scmp.ne.s32.totalorder %s37, %s40
    %p46 = scmp.eq.s32.totalorder %s13, 0
    %p47 = por %p45, %p46
    %p48 = scmp.ne.s32.totalorder %s37, %s40
    %p49 = scmp.eq.s32.totalorder %s18, 3
    %p50 = por %p48, %p49
    %p51 = scmp.ne.s32.totalorder %s40, %s41
    %p52 = scmp.eq.s32.totalorder %s18, 0
    %p53 = por %p51, %p52
    %p54 = scmp.ne.s32.totalorder %s40, %s41
    %p55 = scmp.eq.s32.totalorder %s19, 3
    %p56 = por %p54, %p55
    %p58 = scmp.ne.s32.totalorder %s41, %s57
    %p59 = scmp.eq.s32.totalorder %s19, 0
    %p60 = por %p58, %p59
    %s61 = ssub.s32 %s20, %s32
    %s62 = ssub.s32 %s21, %s28
    %s63 = sor.u32 %s61, %s62
    %p64 = scmp.eq.s32.totalorder %s63, 0
    %s66 = sadd.s32 %s65, 1
    %s67 = scalar_select %p64, %s65, %s66
    %p70 = pneg %p64
    %p71 = scmp.eq.s32.totalorder %s13, 3
    %p72 = por %p70, %p71
    %p73 = scmp.ne.s32.totalorder %s65, %s68
    %p74 = scmp.eq.s32.totalorder %s13, 0
    %p75 = por %p73, %p74
    %p76 = scmp.ne.s32.totalorder %s65, %s68
    %p77 = scmp.eq.s32.totalorder %s18, 3
    %p78 = por %p76, %p77
    %p79 = scmp.ne.s32.totalorder %s68, %s69
    %p80 = scmp.eq.s32.totalorder %s18, 0
    %p81 = por %p79, %p80
    %p82 = scmp.ne.s32.totalorder %s68, %s69
    %p83 = scmp.eq.s32.totalorder %s19, 3
    %p84 = por %p82, %p83
    %p86 = scmp.ne.s32.totalorder %s69, %s85
    %p87 = scmp.eq.s32.totalorder %s19, 0
    %p88 = por %p86, %p87
    %s90 = sadd.s32 %s89, 1
    %p93 = scmp.eq.s32.totalorder %s13, 3
    %p94 = scmp.ne.s32.totalorder %s89, %s91
    %p95 = scmp.eq.s32.totalorder %s13, 0
    %p96 = por %p94, %p95
    %p97 = scmp.ne.s32.totalorder %s89, %s91
    %p98 = scmp.eq.s32.totalorder %s18, 3
    %p99 = por %p97, %p98
    %p100 = scmp.ne.s32.totalorder %s91, %s92
    %p101 = scmp.eq.s32.totalorder %s18, 0
    %p102 = por %p100, %p101
    %p103 = scmp.ne.s32.totalorder %s91, %s92
    %p104 = scmp.eq.s32.totalorder %s19, 3
    %p105 = por %p103, %p104
    %p107 = scmp.ne.s32.totalorder %s92, %s106
    %p108 = scmp.eq.s32.totalorder %s19, 0
    %p109 = por %p107, %p108
    %s111 = sadd.s32 %s110, 1
    %p114 = scmp.eq.s32.totalorder %s13, 3
    %p115 = scmp.ne.s32.totalorder %s110, %s112
    %p116 = scmp.eq.s32.totalorder %s13, 0
    %p117 = por %p115, %p116
    %p118 = scmp.ne.s32.totalorder %s110, %s112
    %p119 = scmp.eq.s32.totalorder %s18, 3
    %p120 = por %p118, %p119
    %p121 = scmp.ne.s32.totalorder %s112, %s113
    %p122 = scmp.eq.s32.totalorder %s18, 0
    %p123 = por %p121, %p122
    %p124 = scmp.ne.s32.totalorder %s112, %s113
    %p125 = scmp.eq.s32.totalorder %s19, 3
    %p126 = por %p124, %p125
    %p128 = scmp.ne.s32.totalorder %s113, %s127
    %p129 = scmp.eq.s32.totalorder %s19, 0
    %p130 = por %p128, %p129
    %s132 = sadd.s32 %s131, 1
    %p135 = scmp.eq.s32.totalorder %s13, 3
    %p136 = scmp.ne.s32.totalorder %s131, %s133
    %p137 = scmp.eq.s32.totalorder %s13, 0
    %p138 = por %p136, %p137
    %p139 = scmp.ne.s32.totalorder %s131, %s133
    %p140 = scmp.eq.s32.totalorder %s18, 3
    %p141 = por %p139, %p140
    %p142 = scmp.ne.s32.totalorder %s133, %s134
    %p143 = scmp.eq.s32.totalorder %s18, 0
    %p144 = por %p142, %p143
    %p145 = scmp.ne.s32.totalorder %s133, %s134
    %p146 = scmp.eq.s32.totalorder %s19, 3
    %p147 = por %p145, %p146
    %p149 = scmp.ne.s32.totalorder %s134, %s148
    %p150 = scmp.eq.s32.totalorder %s19, 0
    %p151 = por %p149, %p150
    %s153 = sadd.s32 %s152, 1
    %p156 = scmp.eq.s32.totalorder %s13, 3
    %p157 = scmp.ne.s32.totalorder %s152, %s154
    %p158 = scmp.eq.s32.totalorder %s13, 0
    %p159 = por %p157, %p158
    %p160 = scmp.ne.s32.totalorder %s152, %s154
    %p161 = scmp.eq.s32.totalorder %s18, 3
    %p162 = por %p160, %p161
    %p163 = scmp.ne.s32.totalorder %s154, %s155
    %p164 = scmp.eq.s32.totalorder %s18, 0
    %p165 = por %p163, %p164
    %p166 = scmp.ne.s32.totalorder %s154, %s155
    %p167 = scmp.eq.s32.totalorder %s19, 3
    %p168 = por %p166, %p167
    %p170 = scmp.ne.s32.totalorder %s155, %s169
    %p171 = scmp.eq.s32.totalorder %s19, 0
    %p172 = por %p170, %p171
    %s173 = ssub.s32 %s20, %s32
    %s174 = ssub.s32 %s21, %s28
    %s175 = sor.u32 %s173, %s174
    %p176 = scmp.eq.s32.totalorder %s175, 0
    %s178 = sadd.s32 %s177, 1
    %s179 = scalar_select %p176, %s177, %s178
    %p182 = pneg %p176
    %p183 = scmp.eq.s32.totalorder %s13, 3
    %p184 = por %p182, %p183
    %p185 = scmp.ne.s32.totalorder %s177, %s180
    %p186 = scmp.eq.s32.totalorder %s13, 0
    %p187 = por %p185, %p186
    %p188 = scmp.ne.s32.totalorder %s177, %s180
    %p189 = scmp.eq.s32.totalorder %s18, 3
    %p190 = por %p188, %p189
    %p191 = scmp.ne.s32.totalorder %s180, %s181
    %p192 = scmp.eq.s32.totalorder %s18, 0
    %p193 = por %p191, %p192
    %p194 = scmp.ne.s32.totalorder %s180, %s181
    %p195 = scmp.eq.s32.totalorder %s19, 3
    %p196 = por %p194, %p195
    %p198 = scmp.ne.s32.totalorder %s181, %s197
    %p199 = scmp.eq.s32.totalorder %s19, 0
    %p200 = por %p198, %p199
    %p201 = scmp.le.s32.totalorder 1, %s13
    %p202 = scmp.lt.s32.totalorder %s13, 5
    %p203 = pnand %p201, %p202
    %p204 = pneg %p203
    // Predicated region
    $region9: #{sem_fuse.1} parent=5 // pred_check
      _
    $region10: #{sem_fuse.1} parent=5 // pred_check_branch
      %206 = sbr.rel (%p203) target = $region12
    $region11: #{sem_fuse.1} parent=5 // pred_region
      %s207 = ssub.s32 %s13, 1
      // Predicated region
      $region13: #{sem_fuse.1} parent=11 // pred_check
        %p208 = pneg %p102
      $region14: #{sem_fuse.1} parent=11 // pred_check_branch
        %210 = sbr.rel (%p208) target = $region16
      $region15: #{sem_fuse.1} parent=11 // pred_region
        _
      $region16: #{sem_fuse.1} parent=11 // pred_fallthru
        _
      // Predicated region
      $region17: #{sem_fuse.1} parent=11 // pred_check
        %p211 = pneg %p123
      $region18: #{sem_fuse.1} parent=11 // pred_check_branch
        %213 = sbr.rel (%p211) target = $region20
      $region19: #{sem_fuse.1} parent=11 // pred_region
        _
      $region20: #{sem_fuse.1} parent=11 // pred_fallthru
        _
      // Predicated region
      $region21: #{sem_fuse.1} parent=11 // pred_check
        %p214 = pneg %p144
      $region22: #{sem_fuse.1} parent=11 // pred_check_branch
        %216 = sbr.rel (%p214) target = $region24
      $region23: #{sem_fuse.1} parent=11 // pred_region
        _
      $region24: #{sem_fuse.1} parent=11 // pred_fallthru
        _
      // Predicated region
      $region25: #{sem_fuse.1} parent=11 // pred_check
        %p217 = pneg %p165
      $region26: #{sem_fuse.1} parent=11 // pred_check_branch
        %219 = sbr.rel (%p217) target = $region28
      $region27: #{sem_fuse.1} parent=11 // pred_region
        _
      $region28: #{sem_fuse.1} parent=11 // pred_fallthru
        _
    $region12: #{sem_fuse.1} parent=5 // pred_fallthru
      _
    %p220 = scmp.lt.s32.totalorder %s13, 4
    // Predicated region
    $region29: #{sem_fuse.1} parent=5 // pred_check
      %p221 = pneg %p220
    $region30: #{sem_fuse.1} parent=5 // pred_check_branch
      %223 = sbr.rel (%p221) target = $region32
    $region31: #{sem_fuse.1} parent=5 // pred_region
      // Predicated region
      $region33: #{sem_fuse.1} parent=31 // pred_check
        %p224 = pneg %p47
      $region34: #{sem_fuse.1} parent=31 // pred_check_branch
        %226 = sbr.rel (%p224) target = $region36
      $region35: #{sem_fuse.1} parent=31 // pred_region
        %p227 = scmp.lt.s32.totalorder %s20, 1
        %s228 = scalar_select %p227, %s20, 1
        %p229 = scmp.lt.s32.totalorder %s21, 1
        %s230 = scalar_select %p229, %s21, 1
        %s231 = smul.addr %s228, 2
        %s232 = sadd.s32 %s230, %s231
        %s233 = smul.addr %s232, 4
        %s234 = scalar_lea.vmem %s0, %s233
      $region36: #{sem_fuse.1} parent=31 // pred_fallthru
        _
      // Predicated region
      $region37: #{sem_fuse.1} parent=31 // pred_check
        %p235 = pneg %p75
      $region38: #{sem_fuse.1} parent=31 // pred_check_branch
        %237 = sbr.rel (%p235) target = $region40
      $region39: #{sem_fuse.1} parent=31 // pred_region
        %p238 = scmp.lt.s32.totalorder %s20, 1
        %s239 = scalar_select %p238, %s20, 1
        %p240 = scmp.lt.s32.totalorder %s21, 1
        %s241 = scalar_select %p240, %s21, 1
        %s242 = smul.addr %s239, 2
        %s243 = sadd.s32 %s241, %s242
        %s244 = smul.addr %s243, 4
        %s245 = scalar_lea.vmem %s1, %s244
      $region40: #{sem_fuse.1} parent=31 // pred_fallthru
        _
    $region32: #{sem_fuse.1} parent=5 // pred_fallthru
      _
    %p246 = scmp.le.s32.totalorder 1, %s13
    %p247 = scmp.lt.s32.totalorder %s13, 5
    %p248 = pnand %p246, %p247
    %p249 = pneg %p248
    // Predicated region
    $region41: #{sem_fuse.1} parent=5 // pred_check
      _
    $region42: #{sem_fuse.1} parent=5 // pred_check_branch
      %251 = sbr.rel (%p248) target = $region44
    $region43: #{sem_fuse.1} parent=5 // pred_region
      %s252 = ssub.s32 %s13, 1
      %p253 = scmp.lt.s32.totalorder %s22, 1
      %s254 = scalar_select %p253, %s22, 1
      %p255 = scmp.lt.s32.totalorder %s23, 1
      %s256 = scalar_select %p255, %s23, 1
      %s257 = smul.addr %s254, 2
      %s258 = sadd.s32 %s256, %s257
      %s259 = smul.addr %s258, 4
      %s260 = scalar_lea.vmem %s0, %s259
      %p261 = pneg %p53
      %p262 = pneg %p50
      %p263 = scmp.lt.s32.totalorder %s22, 1
      %s264 = scalar_select %p263, %s22, 1
      %p265 = scmp.lt.s32.totalorder %s23, 1
      %s266 = scalar_select %p265, %s23, 1
      %s267 = smul.addr %s264, 2
      %s268 = sadd.s32 %s266, %s267
      %s269 = smul.addr %s268, 4
      %s270 = scalar_lea.vmem %s1, %s269
      %p271 = pneg %p81
      %p272 = pneg %p78
      %p273 = pneg %p102
      %p274 = pneg %p99
      %p275 = pneg %p123
      %p276 = pneg %p120
      %p277 = pneg %p144
      %p278 = pneg %p141
      %p279 = pneg %p165
      %p280 = pneg %p162
      %p281 = pneg %p193
      %p282 = pneg %p190
      %p283 = scmp.lt.s32.totalorder %s22, 1
      %s284 = scalar_select %p283, %s22, 1
      %p285 = scmp.lt.s32.totalorder %s23, 1
      %s286 = scalar_select %p285, %s23, 1
      %s287 = smul.addr %s284, 2
      %s288 = sadd.s32 %s286, %s287
      %s289 = smul.addr %s288, 4
      %s290 = scalar_lea.vmem %s6, %s289
      %p291 = scmp.lt.s32.totalorder %s22, 1
      %s292 = scalar_select %p291, %s22, 1
      %p293 = scmp.lt.s32.totalorder %s23, 1
      %s294 = scalar_select %p293, %s23, 1
      %s295 = smul.addr %s292, 2
      %s296 = sadd.s32 %s294, %s295
      %s297 = smul.addr %s296, 4
      %s298 = scalar_lea.vmem %s0, %s297
      %p299 = scmp.lt.s32.totalorder %s22, 1
      %s300 = scalar_select %p299, %s22, 1
      %p301 = scmp.lt.s32.totalorder %s23, 1
      %s302 = scalar_select %p301, %s23, 1
      %s303 = smul.addr %s300, 2
      %s304 = sadd.s32 %s302, %s303
      %s305 = smul.addr %s304, 4
      %s306 = scalar_lea.vmem %s1, %s305
      %p307 = scmp.lt.s32.totalorder %s22, 1
      %s308 = scalar_select %p307, %s22, 1
      %p309 = scmp.lt.s32.totalorder %s23, 1
      %s310 = scalar_select %p309, %s23, 1
      %s311 = smul.addr %s308, 2
      %s312 = sadd.s32 %s310, %s311
      %s313 = smul.addr %s312, 4
      %s314 = scalar_lea.vmem %s6, %s313
      %v315 = vld [vmem:[%s2] sm:$0xff]
      %v316 = vld [vmem:[%s3] sm:$0xff]
      %v317 = vld [vmem:[%s4] sm:$0xff]
      %s318 = sld [smem:[#allocation2]]
      %v319 = vld [vmem:[%s298] sm:$0xf]
      %v320 = vld [vmem:[%s306] sm:$0xf]
      %vm321 = vcmask 31744
      %v323 = vsel %vm321, %v316, 0
      %vm325 = vcmask 1043456
      %v327 = vsel %vm325, %v320, 0
      %329 = vmatprep.subr.mxu0 0.0
      %330 = vmatpush1.msra.mxu0 %v327
      %331 = vmatprep.subr.mxu0 0.0
      %332 = vmatpush1.msra.mxu0 0.0
      %333 = vmatprep.subr.mxu0 0.0
      %334 = vmatpush1.msra.mxu0 0.0
      %335 = vmatprep.subr.mxu0 0.0
      %336 = vmatpush1.msra.mxu0 0.0
      %337 = vmatprep.subr.mxu0 0.0
      %338 = vmatpush1.msra.mxu0 0.0
      %339 = vmatprep.subr.mxu0 0.0
      %340 = vmatpush1.msra.mxu0 0.0
      %341 = vmatprep.subr.mxu0 0.0
      %342 = vmatpush1.msra.mxu0 0.0
      %343 = vmatprep.subr.mxu0 0.0
      %344 = vmatpush1.msra.mxu0 0.0
      %345 = vmatprep.subr.mxu0 0.0
      %346 = vmatpush1.msra.mxu0 0.0
      %347 = vmatprep.subr.mxu0 0.0
      %348 = vmatpush1.msra.mxu0 0.0
      %349 = vmatprep.subr.mxu0 0.0
      %350 = vmatpush1.msra.mxu0 0.0
      %351 = vmatprep.subr.mxu0 0.0
      %352 = vmatpush1.msra.mxu0 0.0
      %353 = vmatprep.subr.mxu0 0.0
      %354 = vmatpush1.msra.mxu0 0.0
      %355 = vmatprep.subr.mxu0 0.0
      %356 = vmatpush1.msra.mxu0 0.0
      %357 = vmatprep.subr.mxu0 0.0
      %358 = vmatpush1.msra.mxu0 0.0
      %359 = vmatprep.subr.mxu0 0.0
      %360 = vmatpush1.msra.mxu0 0.0
      %361 = vmatprep.subr.mxu0 0.0
      %362 = vmatpush1.msra.mxu0 0.0
      %363 = vmatprep.subr.mxu0 0.0
      %364 = vmatpush1.msra.mxu0 0.0
      %365 = vmatprep.subr.mxu0 0.0
      %366 = vmatpush1.msra.mxu0 0.0
      %367 = vmatprep.subr.mxu0 0.0
      %368 = vmatpush1.msra.mxu0 0.0
      %369 = vmatprep.subr.mxu0 0.0
      %370 = vmatpush1.msra.mxu0 0.0
      %371 = vmatprep.subr.mxu0 0.0
      %372 = vmatpush1.msra.mxu0 0.0
      %373 = vmatprep.subr.mxu0 0.0
      %374 = vmatpush1.msra.mxu0 0.0
      %375 = vmatprep.subr.mxu0 0.0
      %376 = vmatpush1.msra.mxu0 0.0
      %377 = vmatprep.subr.mxu0 0.0
      %378 = vmatpush1.msra.mxu0 0.0
      %379 = vmatprep.subr.mxu0 0.0
      %380 = vmatpush1.msra.mxu0 0.0
      %381 = vmatprep.subr.mxu0 0.0
      %382 = vmatpush1.msra.mxu0 0.0
      %383 = vmatprep.subr.mxu0 0.0
      %384 = vmatpush1.msra.mxu0 0.0
      %385 = vmatprep.subr.mxu0 0.0
      %386 = vmatpush1.msra.mxu0 0.0
      %387 = vmatprep.subr.mxu0 0.0
      %388 = vmatpush1.msra.mxu0 0.0
      %389 = vmatprep.subr.mxu0 0.0
      %390 = vmatpush1.msra.mxu0 0.0
      %391 = vmatprep.subr.mxu0 0.0
      %392 = vmatpush1.msra.mxu0 0.0
      %393 = vmatprep.mubr.f32.mxu0 0.0
      %394 = vmatmul.mubr.f32.gmra.mrb[0].mxu0 %v323
      %v395 = vpop.f32.mrb[0].mxu0
      %v396 = vadd.f32 0.0, %v395
      %v397 = vpop.f32.mrb[0].mxu0
      %398 = vdwg.mxu0
      %v400 = vsel %vm321, %v315, 0
      %v403 = vsel %vm325, %v319, 0
      %405 = vmatprep.subr.mxu0 0.0
      %406 = vmatpush1.msra.mxu0 %v403
      %407 = vmatprep.subr.mxu0 0.0
      %408 = vmatpush1.msra.mxu0 0.0
      %409 = vmatprep.subr.mxu0 0.0
      %410 = vmatpush1.msra.mxu0 0.0
      %411 = vmatprep.subr.mxu0 0.0
      %412 = vmatpush1.msra.mxu0 0.0
      %413 = vmatprep.subr.mxu0 0.0
      %414 = vmatpush1.msra.mxu0 0.0
      %415 = vmatprep.subr.mxu0 0.0
      %416 = vmatpush1.msra.mxu0 0.0
      %417 = vmatprep.subr.mxu0 0.0
      %418 = vmatpush1.msra.mxu0 0.0
      %419 = vmatprep.subr.mxu0 0.0
      %420 = vmatpush1.msra.mxu0 0.0
      %421 = vmatprep.subr.mxu0 0.0
      %422 = vmatpush1.msra.mxu0 0.0
      %423 = vmatprep.subr.mxu0 0.0
      %424 = vmatpush1.msra.mxu0 0.0
      %425 = vmatprep.subr.mxu0 0.0
      %426 = vmatpush1.msra.mxu0 0.0
      %427 = vmatprep.subr.mxu0 0.0
      %428 = vmatpush1.msra.mxu0 0.0
      %429 = vmatprep.subr.mxu0 0.0
      %430 = vmatpush1.msra.mxu0 0.0
      %431 = vmatprep.subr.mxu0 0.0
      %432 = vmatpush1.msra.mxu0 0.0
      %433 = vmatprep.subr.mxu0 0.0
      %434 = vmatpush1.msra.mxu0 0.0
      %435 = vmatprep.subr.mxu0 0.0
      %436 = vmatpush1.msra.mxu0 0.0
      %437 = vmatprep.subr.mxu0 0.0
      %438 = vmatpush1.msra.mxu0 0.0
      %439 = vmatprep.subr.mxu0 0.0
      %440 = vmatpush1.msra.mxu0 0.0
      %441 = vmatprep.subr.mxu0 0.0
      %442 = vmatpush1.msra.mxu0 0.0
      %443 = vmatprep.subr.mxu0 0.0
      %444 = vmatpush1.msra.mxu0 0.0
      %445 = vmatprep.subr.mxu0 0.0
      %446 = vmatpush1.msra.mxu0 0.0
      %447 = vmatprep.subr.mxu0 0.0
      %448 = vmatpush1.msra.mxu0 0.0
      %449 = vmatprep.subr.mxu0 0.0
      %450 = vmatpush1.msra.mxu0 0.0
      %451 = vmatprep.subr.mxu0 0.0
      %452 = vmatpush1.msra.mxu0 0.0
      %453 = vmatprep.subr.mxu0 0.0
      %454 = vmatpush1.msra.mxu0 0.0
      %455 = vmatprep.subr.mxu0 0.0
      %456 = vmatpush1.msra.mxu0 0.0
      %457 = vmatprep.subr.mxu0 0.0
      %458 = vmatpush1.msra.mxu0 0.0
      %459 = vmatprep.subr.mxu0 0.0
      %460 = vmatpush1.msra.mxu0 0.0
      %461 = vmatprep.subr.mxu0 0.0
      %462 = vmatpush1.msra.mxu0 0.0
      %463 = vmatprep.subr.mxu0 0.0
      %464 = vmatpush1.msra.mxu0 0.0
      %465 = vmatprep.subr.mxu0 0.0
      %466 = vmatpush1.msra.mxu0 0.0
      %467 = vmatprep.subr.mxu0 0.0
      %468 = vmatpush1.msra.mxu0 0.0
      %469 = vmatprep.mubr.f32.mxu0 0.0
      %470 = vmatmul.mubr.f32.gmra.mrb[0].mxu0 %v400
      %v471 = vpop.f32.mrb[0].mxu0
      %v472 = vadd.f32 %v396, %v471
      %v473 = vpop.f32.mrb[0].mxu0
      %474 = vdwg.mxu0
      %476 = vset.pattern.permute.xlu0 0
      %477 = vperm.xlu0 %476, %v317
      %v478 = vpop.permute.xlu0 %477
      %v480 = vadd.f32 %v472, %v478
      %v481 = vmax.f32 %v480, 0.0
      %482 = vset.pattern.permute.xlu0 1
      %483 = vperm.xlu0 %482, %v317
      %v484 = vpop.permute.xlu0 %483
      %v486 = vmul.f32 %v481, %v484
      %v487 = vrot.slane %v486, 4
      %v488 = vadd.f32 %v486, %v487
      %v489 = vrot.slane %v488, 2
      %v490 = vadd.f32 %v488, %v489
      %v491 = vrot.slane %v490, 1
      %v492 = vadd.f32 %v490, %v491
      %v493 = vstv %s318
      %v494 = vadd.f32 %v492, %v493
      %v495 = vxor.u32 %v494, 2147483648
      %v496 = vmul.f32 %v495, 1.442695
      %v497 = vpow.pop %v496
      %v498 = vadd.f32 %v497, 1.0
      %v499 = vrcp.pop %v498
      %v500 = vmul.f32 1.0, %v499
      %v501 = vadd.f32 %v500, 1.0
      %v502 = vmul.f32 %v319, %v501
      %503 = vst [vmem:[%s314] sm:$0xf] %v502
      %p504 = scmp.lt.s32.totalorder %s22, 1
      %s505 = scalar_select %p504, %s22, 1
      %p506 = scmp.lt.s32.totalorder %s23, 1
      %s507 = scalar_select %p506, %s23, 1
      %s508 = smul.addr %s505, 2
      %s509 = sadd.s32 %s507, %s508
      %s510 = smul.addr %s509, 4
      %s511 = scalar_lea.vmem %s6, %s510
      // Predicated region
      $region45: #{sem_fuse.1} parent=43 // pred_check
        %p512 = pneg %p190
      $region46: #{sem_fuse.1} parent=43 // pred_check_branch
        %514 = sbr.rel (%p512) target = $region48
      $region47: #{sem_fuse.1} parent=43 // pred_region
        _
      $region48: #{sem_fuse.1} parent=43 // pred_fallthru
        _
    $region44: #{sem_fuse.1} parent=5 // pred_fallthru
      _
    %p515 = scmp.le.s32.totalorder 2, %s13
    // Predicated region
    $region49: #{sem_fuse.1} parent=5 // pred_check
      %p516 = pneg %p515
    $region50: #{sem_fuse.1} parent=5 // pred_check_branch
      %518 = sbr.rel (%p516) target = $region52
    $region51: #{sem_fuse.1} parent=5 // pred_region
      %s519 = ssub.s32 %s13, 2
      // Predicated region
      $region53: #{sem_fuse.1} parent=51 // pred_check
        %p520 = pneg %p196
      $region54: #{sem_fuse.1} parent=51 // pred_check_branch
        %522 = sbr.rel (%p520) target = $region56
      $region55: #{sem_fuse.1} parent=51 // pred_region
        %p523 = scmp.lt.s32.totalorder %s24, 1
        %s524 = scalar_select %p523, %s24, 1
        %p525 = scmp.lt.s32.totalorder %s25, 1
        %s526 = scalar_select %p525, %s25, 1
        %s527 = smul.addr %s524, 2
        %s528 = sadd.s32 %s526, %s527
        %s529 = smul.addr %s528, 4
        %s530 = scalar_lea.vmem %s6, %s529
      $region56: #{sem_fuse.1} parent=51 // pred_fallthru
        _
    $region52: #{sem_fuse.1} parent=5 // pred_fallthru
      _
  $region6: #{sem_fuse.1} parent=0 // loop_footer
    %s17 = sadd.s32 1, %s13
  $region7: #{sem_fuse.1} parent=0 // loop_footer_branch
    %12 = sbr.rel target = $region3
  $region8: #{sem_fuse.1} parent=0 // loop_exit
    _

</llo_original>
